<compile_context>
chip_gen: v7x
topology: tpu7x:2x2x1
jax: 0.10.0
libtpu: 0.0.40
codegen_flags: <defaults>
</compile_context>

<pallas_src>
import functools

import jax
import jax.numpy as jnp
from jax import lax
from jax.experimental import pallas as pl
from jax.experimental.pallas import tpu as pltpu

CHUNK = 512  # inner lane-chunk (multiple of 128): keeps h1/h2 small and vreg-friendly


def _round_up(n, m):
    return ((n + m - 1) // m) * m


def mlp_kernel(x_ref, w1_ref, b1_ref, w2_ref, b2_ref, w3_ref, b3_ref, o_ref):
    # x_ref: (chunks_per_tile, 2, chunk)  feature-major, batch elements on lanes
    # o_ref: (chunks_per_tile, 1, chunk)
    n_chunks = x_ref.shape[0]

    # Tiny resident weights, loaded once per grid step (hoisted out of the loop).
    w1a = w1_ref[:, 0:1]          # (32, 1)
    w1b = w1_ref[:, 1:2]          # (32, 1)
    b1 = b1_ref[...]              # (32, 1)
    w2 = w2_ref[...]              # (16, 32)
    b2 = b2_ref[...]              # (16, 1)
    w3 = w3_ref[...]              # (16, 1)
    b3 = b3_ref[...]              # (1, 1)

    def body(c, carry):
        xc = x_ref[c]                              # (2, chunk)
        x0 = xc[0:1, :]                            # (1, chunk)
        x1 = xc[1:2, :]                            # (1, chunk)

        # Layer 1: Linear(2, 32) + ReLU on the VPU (K=2 is far too skinny for the MXU).
        h1 = jnp.maximum(w1a * x0 + w1b * x1 + b1, 0.0)                 # (32, chunk)

        # Layer 2: Linear(32, 16) + ReLU on the MXU.
        h2 = jnp.dot(w2, h1, preferred_element_type=jnp.float32) + b2   # (16, chunk)
        h2 = jnp.maximum(h2, 0.0)

        # Layer 3: Linear(16, 1) + Sigmoid as VPU multiply + XLU sublane reduce.
        z = jnp.sum(w3 * h2, axis=0, keepdims=True) + b3                # (1, chunk)
        o_ref[c] = jax.nn.sigmoid(z)
        return carry

    lax.fori_loop(0, n_chunks, body, 0)


def _choose_tiling(batch, tile_b):
    """Returns (tile, n_tiles, chunk) with tile % chunk == 0 and n_tiles * tile >= batch."""
    tile_b = max(CHUNK, _round_up(int(tile_b), CHUNK))   # legalize user tile_b
    b128 = _round_up(batch, 128)
    if b128 <= CHUNK:
        return b128, 1, b128                              # one small tile, one chunk
    # >= 2 grid steps when the batch allows so v7x's two TensorCores both get work;
    # balance the tile size across steps so padding stays tiny.
    n_tiles = max(2, pl.cdiv(b128, tile_b))
    tile = _round_up(pl.cdiv(b128, n_tiles), CHUNK)
    return tile, n_tiles, CHUNK


@functools.partial(jax.jit, static_argnames=("tile_b",))
def mlp_forward(x, params, *, tile_b=32768):
    """x: (B, 2) f32 (torch layout).  params: (out,in) weights and (out,1) biases."""
    w1, b1, w2, b2, w3, b3 = params
    B = x.shape[0]

    tile, n_tiles, chunk = _choose_tiling(B, tile_b)
    b_pad = n_tiles * tile
    cpt = tile // chunk                    # chunks per grid step
    n_chunks = b_pad // chunk

    # Single fused pad + deinterleave copy: (B, 2) -> (n_chunks, 2, chunk), with the
    # batch on lanes and the two features on sublanes.  This is the only extra HBM
    # pass over x; feature-major callers can build this view with a free reshape.
    xp = x if b_pad == B else jnp.pad(x, ((0, b_pad - B), (0, 0)))
    x3 = xp.reshape(n_chunks, chunk, 2).transpose(0, 2, 1)      # (n_chunks, 2, chunk)

    out3 = pl.pallas_call(
        mlp_kernel,
        out_shape=jax.ShapeDtypeStruct((n_chunks, 1, chunk), jnp.float32),
        grid=(n_tiles,),
        in_specs=[
            pl.BlockSpec((cpt, 2, chunk), lambda i: (i, 0, 0)),  # x tile (pipelined)
            pl.BlockSpec((32, 2), lambda i: (0, 0)),             # w1 (VMEM resident)
            pl.BlockSpec((32, 1), lambda i: (0, 0)),             # b1
            pl.BlockSpec((16, 32), lambda i: (0, 0)),            # w2
            pl.BlockSpec((16, 1), lambda i: (0, 0)),             # b2
            pl.BlockSpec((16, 1), lambda i: (0, 0)),             # w3 (as a column)
            pl.BlockSpec((1, 1), lambda i: (0, 0)),              # b3
        ],
        out_specs=pl.BlockSpec((cpt, 1, chunk), lambda i: (i, 0, 0)),
        compiler_params=pltpu.CompilerParams(
            dimension_semantics=("parallel",),                   # v7x megacore split
        ),
    )(x3, w1, b1, w2, b2, jnp.reshape(w3, (16, 1)), b3)

    # Output plumbing: free reshape; tail slice only when the batch was padded.
    out_flat = out3.reshape(b_pad)
    if b_pad != B:
        out_flat = out_flat[:B]
    return out_flat.reshape(B, 1)


def init_params(key):
    """Deterministic init mimicking torch.nn.Linear default U(-1/sqrt(fan_in), +).

    Weights in torch's native (out_features, in_features) layout; biases as
    (out_features, 1) columns for the feature-major kernel.
    """
    dims = [(2, 32), (32, 16), (16, 1)]
    params = []
    for fan_in, fan_out in dims:
        key, kw, kb = jax.random.split(key, 3)
        bound = 1.0 / jnp.sqrt(fan_in)
        w = jax.random.uniform(kw, (fan_out, fan_in), jnp.float32, -bound, bound)
        b = jax.random.uniform(kb, (fan_out, 1), jnp.float32, -bound, bound)
        params += [w, b]
    return params


def reference_forward(x, params):
    w1, b1, w2, b2, w3, b3 = params
    h1 = jnp.maximum(x @ w1.T + b1.T, 0.0)
    h2 = jnp.maximum(h1 @ w2.T + b2.T, 0.0)
    return jax.nn.sigmoid(h2 @ w3.T + b3.T)


if __name__ == "__main__":
    key = jax.random.PRNGKey(0)
    key, kx = jax.random.split(key)
    params = init_params(key)

    # Small example consistent with the module: (batch=8, in_features=2).
    B = 8
    x = jax.random.normal(kx, (B, 2), jnp.float32)
    out = jax.block_until_ready(mlp_forward(x, params))
    ref = reference_forward(x, params)
    assert out.shape == (B, 1), out.shape
    assert jnp.allclose(out, ref, atol=1e-4, rtol=1e-4), (out, ref)

    # Larger, non-aligned batch: exercises the 2-step grid, inner chunk loop,
    # and tail padding/slicing.
    key, kx2 = jax.random.split(key)
    B2 = 3000
    x2 = jax.random.normal(kx2, (B2, 2), jnp.float32)
    out2 = jax.block_until_ready(mlp_forward(x2, params))
    ref2 = reference_forward(x2, params)
    assert out2.shape == (B2, 1), out2.shape
    assert jnp.allclose(out2, ref2, atol=1e-4, rtol=1e-4)

    print("KERNEL_OK")
</pallas_src>

<mosaic_0001>
module attributes {stable_mosaic.version = 11 : i64} {
  func.func @mlp_kernel(%arg0: i32, %arg1: memref<1x2x128xf32, #tpu.memory_space<vmem>>, %arg2: memref<32x2xf32, #tpu.memory_space<vmem>>, %arg3: memref<32x1xf32, #tpu.memory_space<vmem>>, %arg4: memref<16x32xf32, #tpu.memory_space<vmem>>, %arg5: memref<16x1xf32, #tpu.memory_space<vmem>>, %arg6: memref<16x1xf32, #tpu.memory_space<vmem>>, %arg7: memref<1x1xf32, #tpu.memory_space<vmem>>, %arg8: memref<1x1x128xf32, #tpu.memory_space<vmem>>) attributes {dimension_semantics = [#tpu.dimension_semantics<parallel>], iteration_bounds = array<i64: 1>, scalar_prefetch = 0 : i64, scratch_operands = 0 : i64, tpu.core_type = #tpu.core_type<tc>, window_params = [{transform_indices = @transform_0, window_bounds = array<i64: 1, 2, 128>}, {pipeline_mode = #tpu.pipeline_mode<synchronous>, transform_indices = @transform_1, window_bounds = array<i64: 32, 2>}, {pipeline_mode = #tpu.pipeline_mode<synchronous>, transform_indices = @transform_2, window_bounds = array<i64: 32, 1>}, {pipeline_mode = #tpu.pipeline_mode<synchronous>, transform_indices = @transform_3, window_bounds = array<i64: 16, 32>}, {pipeline_mode = #tpu.pipeline_mode<synchronous>, transform_indices = @transform_4, window_bounds = array<i64: 16, 1>}, {pipeline_mode = #tpu.pipeline_mode<synchronous>, transform_indices = @transform_5, window_bounds = array<i64: 16, 1>}, {pipeline_mode = #tpu.pipeline_mode<synchronous>, transform_indices = @transform_6, window_bounds = array<i64: 1, 1>}, {transform_indices = @transform_7, window_bounds = array<i64: 1, 1, 128>}]} {
    %c0 = arith.constant 0 : index
    %c0_0 = arith.constant 0 : index
    %0 = vector.load %arg2[%c0, %c0_0] : memref<32x2xf32, #tpu.memory_space<vmem>>, vector<32x1xf32>
    %c0_1 = arith.constant 0 : index
    %c1 = arith.constant 1 : index
    %1 = vector.load %arg2[%c0_1, %c1] : memref<32x2xf32, #tpu.memory_space<vmem>>, vector<32x1xf32>
    %c0_2 = arith.constant 0 : index
    %c0_3 = arith.constant 0 : index
    %2 = vector.load %arg3[%c0_2, %c0_3] : memref<32x1xf32, #tpu.memory_space<vmem>>, vector<32x1xf32>
    %c0_4 = arith.constant 0 : index
    %c0_5 = arith.constant 0 : index
    %3 = vector.load %arg4[%c0_4, %c0_5] : memref<16x32xf32, #tpu.memory_space<vmem>>, vector<16x32xf32>
    %c0_6 = arith.constant 0 : index
    %c0_7 = arith.constant 0 : index
    %4 = vector.load %arg5[%c0_6, %c0_7] : memref<16x1xf32, #tpu.memory_space<vmem>>, vector<16x1xf32>
    %c0_8 = arith.constant 0 : index
    %c0_9 = arith.constant 0 : index
    %5 = vector.load %arg6[%c0_8, %c0_9] : memref<16x1xf32, #tpu.memory_space<vmem>>, vector<16x1xf32>
    %c0_10 = arith.constant 0 : index
    %c0_11 = arith.constant 0 : index
    %6 = vector.load %arg7[%c0_10, %c0_11] : memref<1x1xf32, #tpu.memory_space<vmem>>, vector<1x1xf32>
    %c0_i32 = arith.constant 0 : i32
    %7 = arith.index_cast %c0_i32 : i32 to index
    %c0_12 = arith.constant 0 : index
    %c0_13 = arith.constant 0 : index
    %8 = vector.load %arg1[%7, %c0_12, %c0_13] : memref<1x2x128xf32, #tpu.memory_space<vmem>>, vector<1x2x128xf32>
    %9 = vector.shape_cast %8 : vector<1x2x128xf32> to vector<2x128xf32>
    %10 = vector.extract_strided_slice %9 {offsets = [0, 0], sizes = [1, 128], strides = [1, 1]} : vector<2x128xf32> to vector<1x128xf32>
    %11 = vector.extract_strided_slice %9 {offsets = [1, 0], sizes = [1, 128], strides = [1, 1]} : vector<2x128xf32> to vector<1x128xf32>
    %12 = vector.broadcast %0 : vector<32x1xf32> to vector<32x128xf32>
    %13 = vector.broadcast %10 : vector<1x128xf32> to vector<32x128xf32>
    %14 = arith.mulf %12, %13 : vector<32x128xf32>
    %15 = vector.broadcast %1 : vector<32x1xf32> to vector<32x128xf32>
    %16 = vector.broadcast %11 : vector<1x128xf32> to vector<32x128xf32>
    %17 = arith.mulf %15, %16 : vector<32x128xf32>
    %18 = arith.addf %14, %17 : vector<32x128xf32>
    %19 = vector.broadcast %2 : vector<32x1xf32> to vector<32x128xf32>
    %20 = arith.addf %18, %19 : vector<32x128xf32>
    %cst = arith.constant 0.000000e+00 : f32
    %21 = vector.broadcast %cst : f32 to vector<32x128xf32>
    %22 = arith.maximumf %20, %21 : vector<32x128xf32>
    %cst_14 = arith.constant dense<0.000000e+00> : vector<16x128xf32>
    %23 = tpu.matmul %3, %22, %cst_14 {dimension_numbers = #tpu.dot_dimension_numbers<[1], [0], [0], [1], [0, 0, 1, 1], [], []>} : vector<16x32xf32>, vector<32x128xf32>, vector<16x128xf32> -> vector<16x128xf32>
    %24 = vector.broadcast %4 : vector<16x1xf32> to vector<16x128xf32>
    %25 = arith.addf %23, %24 : vector<16x128xf32>
    %cst_15 = arith.constant 0.000000e+00 : f32
    %26 = vector.broadcast %cst_15 : f32 to vector<16x128xf32>
    %27 = arith.maximumf %25, %26 : vector<16x128xf32>
    %28 = vector.broadcast %5 : vector<16x1xf32> to vector<16x128xf32>
    %29 = arith.mulf %28, %27 : vector<16x128xf32>
    %cst_16 = arith.constant dense<0.000000e+00> : vector<128xf32>
    %30 = vector.multi_reduction <add>, %29, %cst_16 [0] : vector<16x128xf32> to vector<128xf32>
    %31 = vector.shape_cast %30 : vector<128xf32> to vector<1x128xf32>
    %32 = vector.broadcast %6 : vector<1x1xf32> to vector<1x128xf32>
    %33 = arith.addf %31, %32 : vector<1x128xf32>
    %34 = arith.negf %33 : vector<1x128xf32>
    %35 = math.exp %34 : vector<1x128xf32>
    %cst_17 = arith.constant 1.000000e+00 : f32
    %36 = vector.broadcast %cst_17 : f32 to vector<1x128xf32>
    %37 = arith.addf %36, %35 : vector<1x128xf32>
    %38 = arith.divf %36, %37 : vector<1x128xf32>
    %39 = arith.index_cast %c0_i32 : i32 to index
    %c0_18 = arith.constant 0 : index
    %c0_19 = arith.constant 0 : index
    %40 = vector.load %arg8[%39, %c0_18, %c0_19] : memref<1x1x128xf32, #tpu.memory_space<vmem>>, vector<1x1x128xf32>
    %41 = vector.shape_cast %40 : vector<1x1x128xf32> to vector<1x128xf32>
    %42 = vector.shape_cast %38 : vector<1x128xf32> to vector<1x1x128xf32>
    tpu.vector_store %arg8[%39, %c0_18, %c0_19], %42 {strides = array<i32>} : memref<1x1x128xf32, #tpu.memory_space<vmem>>, vector<1x1x128xf32>,
    %c1_i32 = arith.constant 1 : i32
    return
  }
  func.func @transform_0(%arg0: i32) -> (i32, i32, i32) {
    %c0_i32 = arith.constant 0 : i32
    %c0_i32_0 = arith.constant 0 : i32
    %c0_i32_1 = arith.constant 0 : i32
    return %arg0, %c0_i32, %c0_i32_0 : i32, i32, i32
  }
  func.func @transform_1(%arg0: i32) -> (i32, i32) {
    %c0_i32 = arith.constant 0 : i32
    %c0_i32_0 = arith.constant 0 : i32
    %c0_i32_1 = arith.constant 0 : i32
    return %c0_i32, %c0_i32_0 : i32, i32
  }
  func.func @transform_2(%arg0: i32) -> (i32, i32) {
    %c0_i32 = arith.constant 0 : i32
    %c0_i32_0 = arith.constant 0 : i32
    %c0_i32_1 = arith.constant 0 : i32
    return %c0_i32, %c0_i32_0 : i32, i32
  }
  func.func @transform_3(%arg0: i32) -> (i32, i32) {
    %c0_i32 = arith.constant 0 : i32
    %c0_i32_0 = arith.constant 0 : i32
    %c0_i32_1 = arith.constant 0 : i32
    return %c0_i32, %c0_i32_0 : i32, i32
  }
  func.func @transform_4(%arg0: i32) -> (i32, i32) {
    %c0_i32 = arith.constant 0 : i32
    %c0_i32_0 = arith.constant 0 : i32
    %c0_i32_1 = arith.constant 0 : i32
    return %c0_i32, %c0_i32_0 : i32, i32
  }
  func.func @transform_5(%arg0: i32) -> (i32, i32) {
    %c0_i32 = arith.constant 0 : i32
    %c0_i32_0 = arith.constant 0 : i32
    %c0_i32_1 = arith.constant 0 : i32
    return %c0_i32, %c0_i32_0 : i32, i32
  }
  func.func @transform_6(%arg0: i32) -> (i32, i32) {
    %c0_i32 = arith.constant 0 : i32
    %c0_i32_0 = arith.constant 0 : i32
    %c0_i32_1 = arith.constant 0 : i32
    return %c0_i32, %c0_i32_0 : i32, i32
  }
  func.func @transform_7(%arg0: i32) -> (i32, i32, i32) {
    %c0_i32 = arith.constant 0 : i32
    %c0_i32_0 = arith.constant 0 : i32
    %c0_i32_1 = arith.constant 0 : i32
    return %arg0, %c0_i32, %c0_i32_0 : i32, i32, i32
  }
}

</mosaic_0001>

<llo_original>
// kernel: mlp_forward.1
$region0: #{mlp_forward.1}
  #allocation0 [shape = 'u32[]', space=smem, size = 0x4, offset = 0x4, fixed_abs, tag = 'smem constant byte address 0x4 - core index']
  #allocation1 [shape = 'u32[144,128]{1,0:T(1,128)}', space=vmem, size = 0x12000, scoped, tag = 'internal scratch']
  #allocation2 [shape = 'f32[1,1]{1,0:T(1,128)S(1)}', space=vmem, size = 0x200, scoped, tag = 'scoped memory for mlp_forward.1']
  %s0 = inlined_call_operand.vmem [shape: f32[1,2,128], index: 0, kind: input, shape index: {}]
  %s1 = inlined_call_operand.vmem [shape: f32[32,2], index: 1, kind: input, shape index: {}]
  %s2 = inlined_call_operand.vmem [shape: f32[32,1], index: 2, kind: input, shape index: {}]
  %s3 = inlined_call_operand.vmem [shape: f32[16,32], index: 3, kind: input, shape index: {}]
  %s4 = inlined_call_operand.vmem [shape: f32[16,1], index: 4, kind: input, shape index: {}]
  %s5 = inlined_call_operand.vmem [shape: f32[16,1], index: 5, kind: input, shape index: {}]
  %s6 = inlined_call_operand.<no memory space> [shape: f32[1,1], index: 6, kind: input, shape index: {}]
  %s7 = inlined_call_operand.vmem [shape: f32[1,1,128], index: 7, kind: output, shape index: {}]
  %s8 = sld [smem:[#allocation0]]
  $region38: #{mlp_forward.1} parent=0
    _
  %s10 = ssub.s32 1, %s8
  %s11 = scalar_select 0, %s10, %s8
  %v12 = vstv %s6
  %13 = vst [vmem:[#allocation2] sm:$0x1] %v12
  // Predicated region
  $region2: #{mlp_forward.1} parent=0 // pred_check
    _
  $region3: #{mlp_forward.1} parent=0 // pred_check_branch
    %15 = sbr.rel (0) target = $region5
  $region4: #{mlp_forward.1} parent=0 // pred_region
    _
  $region5: #{mlp_forward.1} parent=0 // pred_fallthru
    _
  // Predicated region
  $region6: #{mlp_forward.1} parent=0 // pred_check
    _
  $region7: #{mlp_forward.1} parent=0 // pred_check_branch
    %17 = sbr.rel (0) target = $region9
  $region8: #{mlp_forward.1} parent=0 // pred_region
    _
  $region9: #{mlp_forward.1} parent=0 // pred_fallthru
    _
  // Predicated region
  $region10: #{mlp_forward.1} parent=0 // pred_check
    _
  $region11: #{mlp_forward.1} parent=0 // pred_check_branch
    %19 = sbr.rel (0) target = $region13
  $region12: #{mlp_forward.1} parent=0 // pred_region
    _
  $region13: #{mlp_forward.1} parent=0 // pred_fallthru
    _
  // Predicated region
  $region14: #{mlp_forward.1} parent=0 // pred_check
    _
  $region15: #{mlp_forward.1} parent=0 // pred_check_branch
    %21 = sbr.rel (0) target = $region17
  $region16: #{mlp_forward.1} parent=0 // pred_region
    _
  $region17: #{mlp_forward.1} parent=0 // pred_fallthru
    _
  // Predicated region
  $region18: #{mlp_forward.1} parent=0 // pred_check
    _
  $region19: #{mlp_forward.1} parent=0 // pred_check_branch
    %23 = sbr.rel (0) target = $region21
  $region20: #{mlp_forward.1} parent=0 // pred_region
    _
  $region21: #{mlp_forward.1} parent=0 // pred_fallthru
    _
  // Predicated region
  $region22: #{mlp_forward.1} parent=0 // pred_check
    _
  $region23: #{mlp_forward.1} parent=0 // pred_check_branch
    %25 = sbr.rel (0) target = $region25
  $region24: #{mlp_forward.1} parent=0 // pred_region
    _
  $region25: #{mlp_forward.1} parent=0 // pred_fallthru
    _
  // Predicated region
  $region26: #{mlp_forward.1} parent=0 // pred_check
    _
  $region27: #{mlp_forward.1} parent=0 // pred_check_branch
    %27 = sbr.rel (0) target = $region29
  $region28: #{mlp_forward.1} parent=0 // pred_region
    _
  $region29: #{mlp_forward.1} parent=0 // pred_fallthru
    _
  %v28 = vld [vmem:[%s1] sm:$0xff]
  %v29 = vld [vmem:[%s1 + $0x8] sm:$0xff]
  %v30 = vld [vmem:[%s1 + $0x10] sm:$0xff]
  %v31 = vld [vmem:[%s1 + $0x18] sm:$0xff]
  %v32 = vld [vmem:[%s2] sm:$0xff]
  %v33 = vld [vmem:[%s2 + $0x8] sm:$0xff]
  %v34 = vld [vmem:[%s2 + $0x10] sm:$0xff]
  %v35 = vld [vmem:[%s2 + $0x18] sm:$0xff]
  %v36 = vld [vmem:[%s3] sm:$0xff]
  %v37 = vld [vmem:[%s3 + $0x8] sm:$0xff]
  %v38 = vld [vmem:[%s4] sm:$0xff]
  %v39 = vld [vmem:[%s4 + $0x8] sm:$0xff]
  %v40 = vld [vmem:[%s5] sm:$0xff]
  %v41 = vld [vmem:[%s5 + $0x8] sm:$0xff]
  %v42 = vld [vmem:[#allocation2] sm:$0x1]
  %v43 = vld [vmem:[%s0] sm:$0x3]
  %45 = vset.pattern.permute.xlu0 0
  %46 = vperm.xlu0 %45, %v28
  %v47 = vpop.permute.xlu0 %46
  %50 = vset.pattern.permute.xlu0 0
  %51 = vperm.xlu0 %50, %v29
  %v52 = vpop.permute.xlu0 %51
  %55 = vset.pattern.permute.xlu0 0
  %56 = vperm.xlu0 %55, %v30
  %v57 = vpop.permute.xlu0 %56
  %60 = vset.pattern.permute.xlu0 0
  %61 = vperm.xlu0 %60, %v31
  %v62 = vpop.permute.xlu0 %61
  %v64 = vlaneseq
  %v65 = vshrl.u32 %v64, 7
  %v66 = vsub.s32 0, %v65
  %v67 = vrot.slane %v43, %v66
  %v68 = vmul.f32 %v47, %v67
  %v69 = vmul.f32 %v52, %v67
  %v70 = vmul.f32 %v57, %v67
  %v71 = vmul.f32 %v62, %v67
  %72 = vset.pattern.permute.xlu0 1
  %73 = vperm.xlu0 %72, %v28
  %v74 = vpop.permute.xlu0 %73
  %76 = vset.pattern.permute.xlu0 1
  %77 = vperm.xlu0 %76, %v29
  %v78 = vpop.permute.xlu0 %77
  %80 = vset.pattern.permute.xlu0 1
  %81 = vperm.xlu0 %80, %v30
  %v82 = vpop.permute.xlu0 %81
  %84 = vset.pattern.permute.xlu0 1
  %85 = vperm.xlu0 %84, %v31
  %v86 = vpop.permute.xlu0 %85
  %v88 = vlaneseq
  %v89 = vshrl.u32 %v88, 7
  %v90 = vsub.s32 1, %v89
  %v91 = vrot.slane %v43, %v90
  %v92 = vmul.f32 %v74, %v91
  %v93 = vmul.f32 %v78, %v91
  %v94 = vmul.f32 %v82, %v91
  %v95 = vmul.f32 %v86, %v91
  %v96 = vadd.f32 %v68, %v92
  %v97 = vadd.f32 %v69, %v93
  %v98 = vadd.f32 %v70, %v94
  %v99 = vadd.f32 %v71, %v95
  %101 = vset.pattern.permute.xlu0 0
  %102 = vperm.xlu0 %101, %v32
  %v103 = vpop.permute.xlu0 %102
  %106 = vset.pattern.permute.xlu0 0
  %107 = vperm.xlu0 %106, %v33
  %v108 = vpop.permute.xlu0 %107
  %111 = vset.pattern.permute.xlu0 0
  %112 = vperm.xlu0 %111, %v34
  %v113 = vpop.permute.xlu0 %112
  %116 = vset.pattern.permute.xlu0 0
  %117 = vperm.xlu0 %116, %v35
  %v118 = vpop.permute.xlu0 %117
  %v120 = vadd.f32 %v96, %v103
  %v121 = vadd.f32 %v97, %v108
  %v122 = vadd.f32 %v98, %v113
  %v123 = vadd.f32 %v99, %v118
  %v124 = vmax.f32 %v120, 0.0
  %v125 = vmax.f32 %v121, 0.0
  %v126 = vmax.f32 %v122, 0.0
  %v127 = vmax.f32 %v123, 0.0
  %129 = vset.pattern.permute.xlu0 0
  %130 = vperm.xlu0 %129, %v38
  %v131 = vpop.permute.xlu0 %130
  %134 = vset.pattern.permute.xlu0 0
  %135 = vperm.xlu0 %134, %v39
  %v136 = vpop.permute.xlu0 %135
  %vm138 = vcmask 261120
  %v140 = vsel %vm138, %v36, 0
  %v143 = vsel %vm138, %v37, 0
  %145 = vmatprep.subr.mxu0 0.0
  %146 = vmatpush1.msra.mxu0 %v124
  %147 = vmatprep.subr.mxu0 0.0
  %148 = vmatpush1.msra.mxu0 %v125
  %149 = vmatprep.subr.mxu0 0.0
  %150 = vmatpush1.msra.mxu0 %v126
  %151 = vmatprep.subr.mxu0 0.0
  %152 = vmatpush1.msra.mxu0 %v127
  %153 = vmatprep.subr.mxu0 0.0
  %154 = vmatpush1.msra.mxu0 0.0
  %155 = vmatprep.subr.mxu0 0.0
  %156 = vmatpush1.msra.mxu0 0.0
  %157 = vmatprep.subr.mxu0 0.0
  %158 = vmatpush1.msra.mxu0 0.0
  %159 = vmatprep.subr.mxu0 0.0
  %160 = vmatpush1.msra.mxu0 0.0
  %161 = vmatprep.subr.mxu0 0.0
  %162 = vmatpush1.msra.mxu0 0.0
  %163 = vmatprep.subr.mxu0 0.0
  %164 = vmatpush1.msra.mxu0 0.0
  %165 = vmatprep.subr.mxu0 0.0
  %166 = vmatpush1.msra.mxu0 0.0
  %167 = vmatprep.subr.mxu0 0.0
  %168 = vmatpush1.msra.mxu0 0.0
  %169 = vmatprep.subr.mxu0 0.0
  %170 = vmatpush1.msra.mxu0 0.0
  %171 = vmatprep.subr.mxu0 0.0
  %172 = vmatpush1.msra.mxu0 0.0
  %173 = vmatprep.subr.mxu0 0.0
  %174 = vmatpush1.msra.mxu0 0.0
  %175 = vmatprep.subr.mxu0 0.0
  %176 = vmatpush1.msra.mxu0 0.0
  %177 = vmatprep.subr.mxu0 0.0
  %178 = vmatpush1.msra.mxu0 0.0
  %179 = vmatprep.subr.mxu0 0.0
  %180 = vmatpush1.msra.mxu0 0.0
  %181 = vmatprep.subr.mxu0 0.0
  %182 = vmatpush1.msra.mxu0 0.0
  %183 = vmatprep.subr.mxu0 0.0
  %184 = vmatpush1.msra.mxu0 0.0
  %185 = vmatprep.subr.mxu0 0.0
  %186 = vmatpush1.msra.mxu0 0.0
  %187 = vmatprep.subr.mxu0 0.0
  %188 = vmatpush1.msra.mxu0 0.0
  %189 = vmatprep.subr.mxu0 0.0
  %190 = vmatpush1.msra.mxu0 0.0
  %191 = vmatprep.subr.mxu0 0.0
  %192 = vmatpush1.msra.mxu0 0.0
  %193 = vmatprep.subr.mxu0 0.0
  %194 = vmatpush1.msra.mxu0 0.0
  %195 = vmatprep.subr.mxu0 0.0
  %196 = vmatpush1.msra.mxu0 0.0
  %197 = vmatprep.subr.mxu0 0.0
  %198 = vmatpush1.msra.mxu0 0.0
  %199 = vmatprep.subr.mxu0 0.0
  %200 = vmatpush1.msra.mxu0 0.0
  %201 = vmatprep.subr.mxu0 0.0
  %202 = vmatpush1.msra.mxu0 0.0
  %203 = vmatprep.subr.mxu0 0.0
  %204 = vmatpush1.msra.mxu0 0.0
  %205 = vmatprep.subr.mxu0 0.0
  %206 = vmatpush1.msra.mxu0 0.0
  %207 = vmatprep.subr.mxu0 0.0
  %208 = vmatpush1.msra.mxu0 0.0
  %209 = vmatprep.mubr.f32.mxu0 0.0
  %210 = vmatmul.mubr.f32.gmra.mrb[0].mxu0 %v140
  %v211 = vpop.f32.mrb[0].mxu0
  %v212 = vadd.f32 %v131, %v211
  %v213 = vpop.f32.mrb[0].mxu0
  %214 = vmatprep.mubr.f32.mxu0 0.0
  %215 = vmatmul.mubr.f32.gmra.mrb[0].mxu0 %v143
  %v216 = vpop.f32.mrb[0].mxu0
  %v217 = vadd.f32 %v136, %v216
  %v218 = vpop.f32.mrb[0].mxu0
  %219 = vdwg.mxu0
  %v220 = vmax.f32 %v212, 0.0
  %v221 = vmax.f32 %v217, 0.0
  %223 = vset.pattern.permute.xlu0 0
  %224 = vperm.xlu0 %223, %v40
  %v225 = vpop.permute.xlu0 %224
  %228 = vset.pattern.permute.xlu0 0
  %229 = vperm.xlu0 %228, %v41
  %v230 = vpop.permute.xlu0 %229
  %v232 = vmul.f32 %v225, %v220
  %v233 = vmul.f32 %v230, %v221
  %v234 = vadd.f32 %v232, %v233
  %v235 = vrot.slane %v234, 4
  %v236 = vadd.f32 %v234, %v235
  %v237 = vrot.slane %v236, 2
  %v238 = vadd.f32 %v236, %v237
  %v239 = vrot.slane %v238, 1
  %v240 = vadd.f32 %v238, %v239
  %242 = vset.pattern.permute.xlu0 0
  %243 = vperm.xlu0 %242, %v42
  %v244 = vpop.permute.xlu0 %243
  %v246 = vlaneseq
  %v247 = vshrl.u32 %v246, 7
  %v248 = vsub.s32 0, %v247
  %v249 = vrot.slane %v244, %v248
  %v250 = vadd.f32 %v240, %v249
  %v251 = vxor.u32 %v250, 2147483648
  %v252 = vmul.f32 %v251, 1.442695
  %v253 = vpow.pop %v252
  %v254 = vadd.f32 %v253, 1.0
  %v255 = vrcp.pop %v254
  %v256 = vmul.f32 1.0, %v255
  %257 = vst [vmem:[%s7] sm:$0x1] %v256
  // Predicated region
  $region30: #{mlp_forward.1} parent=0 // pred_check
    _
  $region31: #{mlp_forward.1} parent=0 // pred_check_branch
    %259 = sbr.rel (0) target = $region33
  $region32: #{mlp_forward.1} parent=0 // pred_region
    _
  $region33: #{mlp_forward.1} parent=0 // pred_fallthru
    _
  // Predicated region
  $region34: #{mlp_forward.1} parent=0 // pred_check
    _
  $region35: #{mlp_forward.1} parent=0 // pred_check_branch
    %261 = sbr.rel (0) target = $region37
  $region36: #{mlp_forward.1} parent=0 // pred_region
    _
  $region37: #{mlp_forward.1} parent=0 // pred_fallthru
    _

</llo_original>
